<compile_context>
chip_gen: v5e
topology: v5e:2x2
jax: 0.10.0
libtpu: 0.0.40
codegen_flags: <defaults>
</compile_context>

<pallas_src>
import functools

import jax
import jax.numpy as jnp
from jax.experimental import pallas as pl
from jax.experimental.pallas import tpu as pltpu


def _cdiv(a, b):
    return -(-a // b)


def _pow(x, p):
    """x**p with integer fast paths (keeps the EUP out of the hot loop)."""
    ip = int(p)
    if float(p) == float(ip) and 1 <= ip <= 4:
        out = x
        for _ in range(ip - 1):
            out = out * x
        return out
    return jnp.power(x, p)


def _dice_kernel_3d(p_ref, t_ref, num_ref, den_ref, *, p, rows_total,
                    rows_per_tile, tiles_per_chunk, ragged):
    """Inputs viewed as [N, R, 128]; block = (N, rows_per_tile, 128).

    grid = (chunks, tiles_per_chunk); axis 0 is parallel (v7x megacore),
    axis 1 is the reduction.  The (1, N, 128) output blocks stay resident
    across the reduction axis and act as lane-wide accumulators.
    """
    c = pl.program_id(0)
    k = pl.program_id(1)

    @pl.when(k == 0)
    def _():
        num_ref[...] = jnp.zeros_like(num_ref)
        den_ref[...] = jnp.zeros_like(den_ref)

    x = p_ref[...].astype(jnp.float32)   # (N, rt, 128)
    y = t_ref[...].astype(jnp.float32)

    if ragged:
        # Zero rows past the real extent (partial / overhang tiles read
        # undefined padding that must not contribute).
        gt = c * tiles_per_chunk + k
        row = gt * rows_per_tile + jax.lax.broadcasted_iota(
            jnp.int32, x.shape, 1)
        valid = row < rows_total
        x = jnp.where(valid, x, 0.0)
        y = jnp.where(valid, y, 0.0)

    num_ref[...] += jnp.sum(x * y, axis=1)[None]
    den_ref[...] += jnp.sum(_pow(x, p) + _pow(y, p), axis=1)[None]


def _dice_kernel_2d(p_ref, t_ref, num_ref, den_ref, *, p, d_total, tile_d,
                    tiles_per_chunk, ragged):
    """Fallback for D % 128 != 0: inputs [N, D]; block = (N, tile_d)."""
    c = pl.program_id(0)
    k = pl.program_id(1)

    @pl.when(k == 0)
    def _():
        num_ref[...] = jnp.zeros_like(num_ref)
        den_ref[...] = jnp.zeros_like(den_ref)

    x = p_ref[...].astype(jnp.float32)   # (N, tile_d)
    y = t_ref[...].astype(jnp.float32)

    if ragged:
        gt = c * tiles_per_chunk + k
        col = gt * tile_d + jax.lax.broadcasted_iota(jnp.int32, x.shape, 1)
        valid = col < d_total
        x = jnp.where(valid, x, 0.0)
        y = jnp.where(valid, y, 0.0)

    num_ref[...] += jnp.sum(x * y, axis=1, keepdims=True)[None]
    den_ref[...] += jnp.sum(_pow(x, p) + _pow(y, p), axis=1,
                            keepdims=True)[None]


def _plan_chunks(total_tiles, max_chunks):
    chunks = max(1, min(max_chunks, total_tiles))
    tpc = _cdiv(total_tiles, chunks)
    if chunks * tpc > total_tiles:
        # Overhang grid steps re-read the last real tile (clamped index) and
        # are fully masked out inside the kernel.
        def tile_index(c, k):
            return jnp.minimum(c * tpc + k, total_tiles - 1)
    else:
        def tile_index(c, k):
            return c * tpc + k
    return chunks, tpc, tile_index


def binary_dice_loss(predict, target, *, smooth=1.0, p=2, reduction="mean",
                     target_block_bytes=2 << 20, num_chunks=2):
    assert predict.shape[0] == target.shape[0], \
        "predict & target batch size don't match"
    assert p > 0, "p must be > 0 (zero-masking is only exact for p > 0)"
    n = predict.shape[0]

    # Free, layout-preserving views; keep the native dtype (upcast in-vreg).
    predict2 = predict.reshape(n, -1)
    target2 = target.reshape(n, -1)
    d = predict2.shape[1]
    assert d > 0, "predict must have at least one feature element"

    if d < 128:
        # Tiny feature dim: pad up to one 128-lane vector (negligible copy;
        # exact for p > 0) so the fast 3-D path below applies.
        pad = ((0, 0), (0, 128 - d))
        predict2 = jnp.pad(predict2, pad)
        target2 = jnp.pad(target2, pad)
        d = 128

    itemsize = max(predict2.dtype.itemsize, target2.dtype.itemsize)
    cparams = pltpu.CompilerParams(
        dimension_semantics=("parallel", "arbitrary"),
        vmem_limit_bytes=32 * 1024 * 1024)

    if d % 128 == 0:
        # Fast path: view each row's D as (R, 128) -> fully packed vregs and
        # lane-wide (N, 128) accumulators.
        r = d // 128
        pr3 = predict2.reshape(n, r, 128)
        tg3 = target2.reshape(n, r, 128)
        row_bytes = n * 128 * itemsize
        rt_target = max(1, target_block_bytes // row_bytes)
        if r <= rt_target or r <= 8:
            rt = r
        else:
            rt = max(8, (min(rt_target, r) // 8) * 8)   # sublane multiple of 8
        total_tiles = _cdiv(r, rt)
        chunks, tpc, tile_index = _plan_chunks(total_tiles, num_chunks)
        ragged = chunks * tpc * rt != r

        kernel = functools.partial(
            _dice_kernel_3d, p=p, rows_total=r, rows_per_tile=rt,
            tiles_per_chunk=tpc, ragged=ragged)
        in_spec = pl.BlockSpec((n, rt, 128),
                               lambda c, k: (0, tile_index(c, k), 0))
        out_spec = pl.BlockSpec((1, n, 128), lambda c, k: (c, 0, 0))
        num_p, den_p = pl.pallas_call(
            kernel,
            out_shape=(jax.ShapeDtypeStruct((chunks, n, 128), jnp.float32),
                       jax.ShapeDtypeStruct((chunks, n, 128), jnp.float32)),
            grid_spec=pltpu.PrefetchScalarGridSpec(
                num_scalar_prefetch=0,
                grid=(chunks, tpc),
                in_specs=[in_spec, in_spec],
                out_specs=(out_spec, out_spec)),
            compiler_params=cparams,
        )(pr3, tg3)
    else:
        # General path (D not a multiple of 128): [N, D] blocks + lane mask.
        col_bytes = max(1, n * itemsize)
        tile_d = max(128, (target_block_bytes // col_bytes) // 128 * 128)
        tile_d = min(tile_d, _cdiv(d, 128) * 128)
        total_tiles = _cdiv(d, tile_d)
        chunks, tpc, tile_index = _plan_chunks(total_tiles, num_chunks)
        ragged = chunks * tpc * tile_d != d

        kernel = functools.partial(
            _dice_kernel_2d, p=p, d_total=d, tile_d=tile_d,
            tiles_per_chunk=tpc, ragged=ragged)
        in_spec = pl.BlockSpec((n, tile_d), lambda c, k: (0, tile_index(c, k)))
        out_spec = pl.BlockSpec((1, n, 1), lambda c, k: (c, 0, 0))
        num_p, den_p = pl.pallas_call(
            kernel,
            out_shape=(jax.ShapeDtypeStruct((chunks, n, 1), jnp.float32),
                       jax.ShapeDtypeStruct((chunks, n, 1), jnp.float32)),
            grid_spec=pltpu.PrefetchScalarGridSpec(
                num_scalar_prefetch=0,
                grid=(chunks, tpc),
                in_specs=[in_spec, in_spec],
                out_specs=(out_spec, out_spec)),
            compiler_params=cparams,
        )(predict2, target2)

    # Tiny wrapper-side combine: fold chunk & lane axes, add smooth, 1 - n/d.
    num = jnp.sum(num_p, axis=(0, 2)) + smooth
    den = jnp.sum(den_p, axis=(0, 2)) + smooth
    loss = 1.0 - num / den                       # shape [N]

    if reduction == "mean":
        return jnp.mean(loss)
    elif reduction == "sum":
        return jnp.sum(loss)
    elif reduction == "none":
        return loss
    else:
        raise Exception("Unexpected reduction {}".format(reduction))


def _reference(predict, target, smooth=1.0, p=2, reduction="mean"):
    n = predict.shape[0]
    pr = predict.reshape(n, -1).astype(jnp.float32)
    tg = target.reshape(n, -1).astype(jnp.float32)
    num = jnp.sum(pr * tg, axis=1) + smooth
    den = jnp.sum(pr ** p + tg ** p, axis=1) + smooth
    loss = 1 - num / den
    if reduction == "mean":
        return loss.mean()
    if reduction == "sum":
        return loss.sum()
    return loss


if __name__ == "__main__":
    key = jax.random.PRNGKey(0)
    k1, k2, k3, k4 = jax.random.split(key, 4)

    # Main path: NCHW, D = 4*16*16 = 1024 (multiple of 128) -> 3-D fast path.
    x = jax.nn.sigmoid(jax.random.normal(k1, (2, 4, 16, 16), jnp.float32))
    y = (jax.random.uniform(k2, (2, 4, 16, 16)) > 0.5).astype(jnp.float32)
    out = jax.block_until_ready(binary_dice_loss(x, y, smooth=1, p=2,
                                                 reduction="mean"))
    ref = _reference(x, y, smooth=1.0, p=2, reduction="mean")
    assert jnp.allclose(out, ref, rtol=1e-5, atol=1e-5), (out, ref)

    # bf16 inputs streamed at native width (in-kernel upcast).
    xb = x.astype(jnp.bfloat16)
    yb = y.astype(jnp.bfloat16)
    outb = jax.block_until_ready(binary_dice_loss(xb, yb, smooth=1, p=2,
                                                  reduction="mean"))
    refb = _reference(xb, yb, smooth=1.0, p=2, reduction="mean")
    assert jnp.allclose(outb, refb, rtol=1e-3, atol=1e-3), (outb, refb)

    # Multi-tile + 2-chunk parallel split + ragged row mask on the 3-D path.
    x2 = jax.nn.sigmoid(jax.random.normal(k3, (2, 4, 24, 32), jnp.float32))
    y2 = (jax.random.uniform(k4, (2, 4, 24, 32)) > 0.5).astype(jnp.float32)
    out2 = jax.block_until_ready(
        binary_dice_loss(x2, y2, smooth=1, p=2, reduction="none",
                         target_block_bytes=4096))
    ref2 = _reference(x2, y2, smooth=1.0, p=2, reduction="none")
    assert jnp.allclose(out2, ref2, rtol=1e-5, atol=1e-5), (out2, ref2)

    # Fallback 2-D kernel: D = 3*7*11 = 231 (not a multiple of 128), no pad.
    x3 = jax.nn.sigmoid(jax.random.normal(k1, (2, 3, 7, 11), jnp.float32))
    y3 = (jax.random.uniform(k2, (2, 3, 7, 11)) > 0.5).astype(jnp.float32)
    out3 = jax.block_until_ready(binary_dice_loss(x3, y3, smooth=1, p=2,
                                                  reduction="sum"))
    ref3 = _reference(x3, y3, smooth=1.0, p=2, reduction="sum")
    assert jnp.allclose(out3, ref3, rtol=1e-5, atol=1e-5), (out3, ref3)

    print("KERNEL_OK")
</pallas_src>

<mosaic_0001>
module attributes {stable_mosaic.version = 11 : i64} {
  func.func @_dice_kernel_3d(%arg0: i32, %arg1: i32, %arg2: memref<2x8x128xf32, #tpu.memory_space<vmem>>, %arg3: memref<2x8x128xf32, #tpu.memory_space<vmem>>, %arg4: memref<1x2x128xf32, #tpu.memory_space<vmem>>, %arg5: memref<1x2x128xf32, #tpu.memory_space<vmem>>) attributes {dimension_semantics = [#tpu.dimension_semantics<parallel>, #tpu.dimension_semantics<arbitrary>], iteration_bounds = array<i64: 1, 1>, scalar_prefetch = 0 : i64, scratch_operands = 0 : i64, tpu.core_type = #tpu.core_type<tc>, window_params = [{transform_indices = @transform_0, window_bounds = array<i64: 2, 8, 128>}, {transform_indices = @transform_1, window_bounds = array<i64: 2, 8, 128>}, {transform_indices = @transform_2, window_bounds = array<i64: 1, 2, 128>}, {transform_indices = @transform_3, window_bounds = array<i64: 1, 2, 128>}]} {
    %c0_i32 = arith.constant 0 : i32
    %0 = arith.cmpi eq, %arg1, %c0_i32 : i32
    %1 = arith.extui %0 : i1 to i32
    %c0_i32_0 = arith.constant 0 : i32
    %2 = arith.cmpi ne, %1, %c0_i32_0 : i32
    scf.if %2 {
      %cst_19 = arith.constant 0.000000e+00 : f32
      %19 = vector.broadcast %cst_19 : f32 to vector<1x2x128xf32>
      %c0_20 = arith.constant 0 : index
      %c0_21 = arith.constant 0 : index
      %c0_22 = arith.constant 0 : index
      %20 = vector.load %arg4[%c0_20, %c0_21, %c0_22] : memref<1x2x128xf32, #tpu.memory_space<vmem>>, vector<1x2x128xf32>
      tpu.vector_store %arg4[%c0_20, %c0_21, %c0_22], %19 {strides = array<i32>} : memref<1x2x128xf32, #tpu.memory_space<vmem>>, vector<1x2x128xf32>,
      %cst_23 = arith.constant 0.000000e+00 : f32
      %21 = vector.broadcast %cst_23 : f32 to vector<1x2x128xf32>
      %c0_24 = arith.constant 0 : index
      %c0_25 = arith.constant 0 : index
      %c0_26 = arith.constant 0 : index
      %22 = vector.load %arg5[%c0_24, %c0_25, %c0_26] : memref<1x2x128xf32, #tpu.memory_space<vmem>>, vector<1x2x128xf32>
      tpu.vector_store %arg5[%c0_24, %c0_25, %c0_26], %21 {strides = array<i32>} : memref<1x2x128xf32, #tpu.memory_space<vmem>>, vector<1x2x128xf32>,
    } else {
    }
    %c0 = arith.constant 0 : index
    %c0_1 = arith.constant 0 : index
    %c0_2 = arith.constant 0 : index
    %3 = vector.load %arg2[%c0, %c0_1, %c0_2] : memref<2x8x128xf32, #tpu.memory_space<vmem>>, vector<2x8x128xf32>
    %c0_3 = arith.constant 0 : index
    %c0_4 = arith.constant 0 : index
    %c0_5 = arith.constant 0 : index
    %4 = vector.load %arg3[%c0_3, %c0_4, %c0_5] : memref<2x8x128xf32, #tpu.memory_space<vmem>>, vector<2x8x128xf32>
    %c0_6 = arith.constant 0 : index
    %c0_7 = arith.constant 0 : index
    %c0_8 = arith.constant 0 : index
    %5 = vector.load %arg4[%c0_6, %c0_7, %c0_8] : memref<1x2x128xf32, #tpu.memory_space<vmem>>, vector<1x2x128xf32>
    %6 = arith.mulf %3, %4 : vector<2x8x128xf32>
    %cst = arith.constant dense<0.000000e+00> : vector<2x128xf32>
    %7 = vector.multi_reduction <add>, %6, %cst [1] : vector<2x8x128xf32> to vector<2x128xf32>
    %8 = vector.shape_cast %7 : vector<2x128xf32> to vector<1x2x128xf32>
    %9 = arith.addf %5, %8 : vector<1x2x128xf32>
    %c0_9 = arith.constant 0 : index
    %c0_10 = arith.constant 0 : index
    %c0_11 = arith.constant 0 : index
    %10 = vector.load %arg4[%c0_9, %c0_10, %c0_11] : memref<1x2x128xf32, #tpu.memory_space<vmem>>, vector<1x2x128xf32>
    tpu.vector_store %arg4[%c0_9, %c0_10, %c0_11], %9 {strides = array<i32>} : memref<1x2x128xf32, #tpu.memory_space<vmem>>, vector<1x2x128xf32>,
    %c0_12 = arith.constant 0 : index
    %c0_13 = arith.constant 0 : index
    %c0_14 = arith.constant 0 : index
    %11 = vector.load %arg5[%c0_12, %c0_13, %c0_14] : memref<1x2x128xf32, #tpu.memory_space<vmem>>, vector<1x2x128xf32>
    %12 = arith.mulf %3, %3 : vector<2x8x128xf32>
    %13 = arith.mulf %4, %4 : vector<2x8x128xf32>
    %14 = arith.addf %12, %13 : vector<2x8x128xf32>
    %cst_15 = arith.constant dense<0.000000e+00> : vector<2x128xf32>
    %15 = vector.multi_reduction <add>, %14, %cst_15 [1] : vector<2x8x128xf32> to vector<2x128xf32>
    %16 = vector.shape_cast %15 : vector<2x128xf32> to vector<1x2x128xf32>
    %17 = arith.addf %11, %16 : vector<1x2x128xf32>
    %c0_16 = arith.constant 0 : index
    %c0_17 = arith.constant 0 : index
    %c0_18 = arith.constant 0 : index
    %18 = vector.load %arg5[%c0_16, %c0_17, %c0_18] : memref<1x2x128xf32, #tpu.memory_space<vmem>>, vector<1x2x128xf32>
    tpu.vector_store %arg5[%c0_16, %c0_17, %c0_18], %17 {strides = array<i32>} : memref<1x2x128xf32, #tpu.memory_space<vmem>>, vector<1x2x128xf32>,
    return
  }
  func.func @transform_0(%arg0: i32, %arg1: i32) -> (i32, i32, i32) {
    %c1_i32 = arith.constant 1 : i32
    %0 = arith.muli %arg0, %c1_i32 : i32
    %1 = arith.addi %0, %arg1 : i32
    %c0_i32 = arith.constant 0 : i32
    %c0_i32_0 = arith.constant 0 : i32
    %c0_i32_1 = arith.constant 0 : i32
    return %c0_i32, %1, %c0_i32_0 : i32, i32, i32
  }
  func.func @transform_1(%arg0: i32, %arg1: i32) -> (i32, i32, i32) {
    %c1_i32 = arith.constant 1 : i32
    %0 = arith.muli %arg0, %c1_i32 : i32
    %1 = arith.addi %0, %arg1 : i32
    %c0_i32 = arith.constant 0 : i32
    %c0_i32_0 = arith.constant 0 : i32
    %c0_i32_1 = arith.constant 0 : i32
    return %c0_i32, %1, %c0_i32_0 : i32, i32, i32
  }
  func.func @transform_2(%arg0: i32, %arg1: i32) -> (i32, i32, i32) {
    %c0_i32 = arith.constant 0 : i32
    %c0_i32_0 = arith.constant 0 : i32
    %c0_i32_1 = arith.constant 0 : i32
    return %arg0, %c0_i32, %c0_i32_0 : i32, i32, i32
  }
  func.func @transform_3(%arg0: i32, %arg1: i32) -> (i32, i32, i32) {
    %c0_i32 = arith.constant 0 : i32
    %c0_i32_0 = arith.constant 0 : i32
    %c0_i32_1 = arith.constant 0 : i32
    return %arg0, %c0_i32, %c0_i32_0 : i32, i32, i32
  }
}

</mosaic_0001>

<llo_original>
// kernel: tpu_custom_call.1
$region0: #{tpu_custom_call.1}
  #allocation0 [shape = 'u32[]', space=smem, size = 0x4, offset = 0x4, fixed_abs, tag = 'smem constant byte address 0x4 - core index']
  #allocation1 [shape = 'u32[72,128]{1,0:T(1,128)}', space=vmem, size = 0x9000, scoped, tag = 'internal scratch']
  %s0 = inlined_call_operand.hbm [shape: f32[2,8,128], index: 0, kind: input, shape index: {}]
  %s1 = inlined_call_operand.hbm [shape: f32[2,8,128], index: 1, kind: input, shape index: {}]
  %s2 = inlined_call_operand.hbm [shape: f32[1,2,128], index: 2, kind: output, shape index: {0}]
  %s3 = inlined_call_operand.hbm [shape: f32[1,2,128], index: 3, kind: output, shape index: {1}]
  %4 = xla_tuple %s2, %s3
  %s5 = sld [smem:[#allocation0]]
  $region38: #{tpu_custom_call.1} parent=0
    _
  %s7 = ssub.s32 1, %s5
  %s8 = scalar_select 0, %s7, %s5
  $region1: #{tpu_custom_call.1} parent=0
    #allocation2 [shape = 'u8[8192]{0}', space=vmem, size = 0x2000, scoped, tag = 'input window, operand 0, single buffered']
    #allocation3 [shape = 's32[1]{0}', space=sflag, size = 0x4, scoped, tag = 'scoped memory for tpu_custom_call.1']
    #allocation4 [shape = 's32[1]{0}', space=sflag, size = 0x4, scoped, tag = 'scoped memory for tpu_custom_call.1']
    #allocation5 [shape = 'u8[8192]{0}', space=vmem, size = 0x2000, scoped, tag = 'input window, operand 1, single buffered']
    #allocation6 [shape = 's32[1]{0}', space=sflag, size = 0x4, scoped, tag = 'scoped memory for tpu_custom_call.1']
    #allocation7 [shape = 'u8[1024]{0}', space=vmem, size = 0x400, scoped, tag = 'output window, operand 0, single buffered']
    #allocation8 [shape = 'u8[1024]{0}', space=vmem, size = 0x400, scoped, tag = 'output window, operand 1, single buffered']
    #allocation9 [shape = 's32[1]{0}', space=sflag, size = 0x4, scoped, tag = 'scoped memory for tpu_custom_call.1']
    %9 = vsyncpa [#allocation3], 0
    %10 = vsyncpa [#allocation6], 0
    %11 = vsyncpa [#allocation4], 0
    %12 = vsyncpa [#allocation9], 0
    // Predicated region
    $region2: #{tpu_custom_call.1} parent=1 // pred_check
      _
    $region3: #{tpu_custom_call.1} parent=1 // pred_check_branch
      %14 = sbr.rel (0) target = $region5
    $region4: #{tpu_custom_call.1} parent=1 // pred_region
      %s15 = sadd.s32 0, 0
      %17 = vsyncadd [#allocation3], 0
      %s18 = smul.addr %s15, 8
      %s19 = scalar_lea.hbm %s0, %s18
      %s20 = sshll.u32 %s19, 4
      %s21 = int_to_ptr.hbm [resolvable:$true] %s20
      %s22 = sshll.u32 [#allocation2], 4
      %s23 = int_to_ptr.vmem [resolvable:$true] %s22
      %28 = dma.hbm_to_vmem [thread:$0]  %s21, 256, %s23, [#allocation3], 128, 128, 8
    $region5: #{tpu_custom_call.1} parent=1 // pred_fallthru
      _
    // Predicated region
    $region6: #{tpu_custom_call.1} parent=1 // pred_check
      _
    $region7: #{tpu_custom_call.1} parent=1 // pred_check_branch
      %30 = sbr.rel (0) target = $region9
    $region8: #{tpu_custom_call.1} parent=1 // pred_region
      %s31 = sadd.s32 0, 0
      %33 = vsyncadd [#allocation6], 0
      %s34 = smul.addr %s31, 8
      %s35 = scalar_lea.hbm %s1, %s34
      %s36 = sshll.u32 %s35, 4
      %s37 = int_to_ptr.hbm [resolvable:$true] %s36
      %s38 = sshll.u32 [#allocation5], 4
      %s39 = int_to_ptr.vmem [resolvable:$true] %s38
      %44 = dma.hbm_to_vmem [thread:$0]  %s37, 256, %s39, [#allocation6], 128, 128, 8
    $region9: #{tpu_custom_call.1} parent=1 // pred_fallthru
      _
    // Predicated region
    $region10: #{tpu_custom_call.1} parent=1 // pred_check
      _
    $region11: #{tpu_custom_call.1} parent=1 // pred_check_branch
      %46 = sbr.rel (0) target = $region13
    $region12: #{tpu_custom_call.1} parent=1 // pred_region
      %48 = dma.done [#allocation3], 256
    $region13: #{tpu_custom_call.1} parent=1 // pred_fallthru
      _
    // Predicated region
    $region14: #{tpu_custom_call.1} parent=1 // pred_check
      _
    $region15: #{tpu_custom_call.1} parent=1 // pred_check_branch
      %50 = sbr.rel (0) target = $region17
    $region16: #{tpu_custom_call.1} parent=1 // pred_region
      %52 = dma.done [#allocation6], 256
    $region17: #{tpu_custom_call.1} parent=1 // pred_fallthru
      _
    %s53 = sadd.s32 0, 0
    %s54 = sadd.s32 0, 0
    %p55 = scmp.eq.s32.totalorder 0, 0
    // Predicated region
    $region18: #{tpu_custom_call.1} parent=1 // pred_check
      %p56 = pneg %p55
    $region19: #{tpu_custom_call.1} parent=1 // pred_check_branch
      %58 = sbr.rel (%p56) target = $region21
    $region20: #{tpu_custom_call.1} parent=1 // pred_region
      %59 = vst [vmem:[#allocation7] sm:$0x3] 0.0
      %60 = vst [vmem:[#allocation8] sm:$0x3] 0.0
    $region21: #{tpu_custom_call.1} parent=1 // pred_fallthru
      _
    %v61 = vld [vmem:[#allocation2] sm:$0xff]
    %v62 = vld [vmem:[#allocation2 + $0x8] sm:$0xff]
    %v63 = vld [vmem:[#allocation5] sm:$0xff]
    %v64 = vld [vmem:[#allocation5 + $0x8] sm:$0xff]
    %v65 = vld [vmem:[#allocation7] sm:$0x3]
    %v66 = vmul.f32 %v61, %v63
    %v67 = vmul.f32 %v62, %v64
    %v68 = vrot.slane %v66, 4
    %v69 = vadd.f32 %v66, %v68
    %v70 = vrot.slane %v69, 2
    %v71 = vadd.f32 %v69, %v70
    %v72 = vrot.slane %v71, 1
    %v73 = vadd.f32 %v71, %v72
    %v74 = vrot.slane %v67, 4
    %v75 = vadd.f32 %v67, %v74
    %v76 = vrot.slane %v75, 2
    %v77 = vadd.f32 %v75, %v76
    %v78 = vrot.slane %v77, 1
    %v79 = vadd.f32 %v77, %v78
    %vm82 = vcmask 1041409
    %v83 = vsel %vm82, %v79, %v73
    %v85 = vadd.f32 %v65, %v83
    %86 = vst [vmem:[#allocation7] sm:$0x3] %v85
    %v87 = vld [vmem:[#allocation8] sm:$0x3]
    %v88 = vmul.f32 %v61, %v61
    %v89 = vmul.f32 %v62, %v62
    %v90 = vmul.f32 %v63, %v63
    %v91 = vmul.f32 %v64, %v64
    %v92 = vadd.f32 %v88, %v90
    %v93 = vadd.f32 %v89, %v91
    %v94 = vrot.slane %v92, 4
    %v95 = vadd.f32 %v92, %v94
    %v96 = vrot.slane %v95, 2
    %v97 = vadd.f32 %v95, %v96
    %v98 = vrot.slane %v97, 1
    %v99 = vadd.f32 %v97, %v98
    %v100 = vrot.slane %v93, 4
    %v101 = vadd.f32 %v93, %v100
    %v102 = vrot.slane %v101, 2
    %v103 = vadd.f32 %v101, %v102
    %v104 = vrot.slane %v103, 1
    %v105 = vadd.f32 %v103, %v104
    %v108 = vsel %vm82, %v105, %v99
    %v110 = vadd.f32 %v87, %v108
    %111 = vst [vmem:[#allocation8] sm:$0x3] %v110
    // Predicated region
    $region22: #{tpu_custom_call.1} parent=1 // pred_check
      _
    $region23: #{tpu_custom_call.1} parent=1 // pred_check_branch
      %113 = sbr.rel (0) target = $region25
    $region24: #{tpu_custom_call.1} parent=1 // pred_region
      %115 = vsyncadd [#allocation4], 0
      %s117 = sshll.u32 [#allocation7], 4
      %s118 = int_to_ptr.vmem [resolvable:$true] %s117
      %s119 = sshll.u32 %s2, 4
      %s120 = int_to_ptr.hbm [resolvable:$true] %s119
      %122 = dma.vmem_to_hbm [thread:$0]  %s118, 32, %s120, [#allocation4]
    $region25: #{tpu_custom_call.1} parent=1 // pred_fallthru
      _
    // Predicated region
    $region26: #{tpu_custom_call.1} parent=1 // pred_check
      _
    $region27: #{tpu_custom_call.1} parent=1 // pred_check_branch
      %124 = sbr.rel (0) target = $region29
    $region28: #{tpu_custom_call.1} parent=1 // pred_region
      %126 = vsyncadd [#allocation9], 0
      %s128 = sshll.u32 [#allocation8], 4
      %s129 = int_to_ptr.vmem [resolvable:$true] %s128
      %s130 = sshll.u32 %s3, 4
      %s131 = int_to_ptr.hbm [resolvable:$true] %s130
      %133 = dma.vmem_to_hbm [thread:$0]  %s129, 32, %s131, [#allocation9]
    $region29: #{tpu_custom_call.1} parent=1 // pred_fallthru
      _
    // Predicated region
    $region30: #{tpu_custom_call.1} parent=1 // pred_check
      _
    $region31: #{tpu_custom_call.1} parent=1 // pred_check_branch
      %135 = sbr.rel (0) target = $region33
    $region32: #{tpu_custom_call.1} parent=1 // pred_region
      %137 = dma.done [#allocation4], 32
    $region33: #{tpu_custom_call.1} parent=1 // pred_fallthru
      _
    // Predicated region
    $region34: #{tpu_custom_call.1} parent=1 // pred_check
      _
    $region35: #{tpu_custom_call.1} parent=1 // pred_check_branch
      %139 = sbr.rel (0) target = $region37
    $region36: #{tpu_custom_call.1} parent=1 // pred_region
      %141 = dma.done [#allocation9], 32
    $region37: #{tpu_custom_call.1} parent=1 // pred_fallthru
      _
    %142 = vsyncpa [#allocation3], 1
    %143 = vsyncpa [#allocation6], 1
    %144 = vsyncpa [#allocation4], 1
    %145 = vsyncpa [#allocation9], 1

</llo_original>
